<compile_context>
chip_gen: v7x
topology: tpu7x:2x2x1
jax: 0.10.0
libtpu: 0.0.40
codegen_flags: <defaults>
</compile_context>

<pallas_src>
import functools

import jax
import jax.numpy as jnp
from jax import lax
from jax.experimental import pallas as pl
from jax.experimental.pallas import tpu as pltpu


def _round_up(x: int, m: int) -> int:
    return ((x + m - 1) // m) * m


def _vmem_capacity_bytes() -> int:
    try:
        return int(pltpu.get_tpu_info().vmem_capacity_bytes)
    except Exception:
        return 64 * 1024 * 1024  # conservative: v7x per-TensorCore VMEM


def _pick_i_chunk(ip: int, target: int) -> int:
    """Largest multiple of 128 <= target that divides ip (ip is a 128-multiple)."""
    c = max(128, min((target // 128) * 128, ip))
    while ip % c != 0:
        c -= 128
    return c


def siglip_mlp_kernel(x_ref, w1_ref, b1_ref, w2_ref, b2_ref, o_ref, *, block_i: int):
    n_chunks = w1_ref.shape[1] // block_i
    # Feed the MXU in the weights' native dtype (bf16 fast path); f32 accumulate.
    x = x_ref[...].astype(w1_ref.dtype)
    c = jnp.float32(0.7978845608028654)  # sqrt(2/pi)

    def body(j, acc):
        off = pl.multiple_of(j * block_i, 128)
        # fc1 chunk: (tm, Hp) @ (Hp, block_i) -> f32
        h = jnp.dot(x, w1_ref[:, pl.ds(off, block_i)],
                    preferred_element_type=jnp.float32)
        h = h + b1_ref[:, pl.ds(off, block_i)].astype(jnp.float32)
        # tanh-GELU (matches torch gelu(approximate='tanh')), f32 on VPU/EUP.
        g = 0.5 * h * (1.0 + jnp.tanh(c * (h + 0.044715 * h * h * h)))
        # fc2 chunk accumulate: (tm, block_i) @ (block_i, Hp) -> f32 acc.
        return acc + jnp.dot(g.astype(w2_ref.dtype),
                             w2_ref[pl.ds(off, block_i), :],
                             preferred_element_type=jnp.float32)

    acc = lax.fori_loop(
        0, n_chunks, body,
        jnp.zeros((x_ref.shape[0], o_ref.shape[1]), jnp.float32),
        unroll=n_chunks <= 8)

    o_ref[...] = (acc + b2_ref[...].astype(jnp.float32)).astype(o_ref.dtype)


def prepare_siglip_mlp_params(w1, b1, w2, b2, *, param_dtype=jnp.bfloat16):
    """Pad the fc1/fc2 params to 128-lane multiples and cast weights ONCE.

    Call this outside the per-step forward so the padded/cast copies are not
    re-materialized through HBM on every call.

    w1: (H, I), b1: (I,), w2: (I, H), b2: (H,)   (nn.Linear weights already
    transposed to (in, out) layout).
    """
    H, I = w1.shape
    assert w2.shape == (I, H) and b1.shape == (I,) and b2.shape == (H,)
    Hp, Ip = _round_up(H, 128), _round_up(I, 128)
    w1p = jnp.pad(w1, ((0, Hp - H), (0, Ip - I))).astype(param_dtype)
    w2p = jnp.pad(w2, ((0, Ip - I), (0, Hp - H))).astype(param_dtype)
    # Biases stay f32: added on the f32 accumulator inside the kernel.
    b1p = jnp.pad(b1.astype(jnp.float32), (0, Ip - I)).reshape(1, Ip)
    b2p = jnp.pad(b2.astype(jnp.float32), (0, Hp - H)).reshape(1, Hp)
    return w1p, b1p, w2p, b2p


@functools.partial(jax.jit, static_argnames=("block_m", "block_i"))
def siglip_mlp(hidden_states, w1p, b1p, w2p, b2p, *, block_m=None, block_i=512):
    """Fused SiglipMLP forward. Params must come from prepare_siglip_mlp_params."""
    B, S, H = hidden_states.shape
    Hp, Ip = w1p.shape
    assert w2p.shape == (Ip, Hp) and b1p.shape == (1, Ip) and b2p.shape == (1, Hp)
    assert Hp % 128 == 0 and Ip % 128 == 0 and Hp >= H
    M = B * S

    x2d = hidden_states.reshape(M, H)
    if Hp != H:  # only needed when hidden_size is not already lane-aligned
        x2d = jnp.pad(x2d, ((0, 0), (0, Hp - H)))

    vmem_cap = _vmem_capacity_bytes()
    if block_m is None:
        # 512 rows easily fits 128 MiB VMEM (v5e/v6e); stay at 256 on v7x (64 MiB).
        block_m = 512 if vmem_cap >= 96 * 1024 * 1024 else 256

    # Row tile: sublane-aligned for the activation dtype (8 f32 / 16 bf16 / 32 i8).
    x_bytes = x2d.dtype.itemsize
    sub = 8 * max(1, 4 // x_bytes)
    tm = _round_up(min(block_m, M), sub)
    num_tiles = pl.cdiv(M, tm)  # no M padding: last partial tile is edge-masked

    chunk = _pick_i_chunk(Ip, block_i)
    w_bytes = w1p.dtype.itemsize

    # VMEM budget: single-buffered resident weights + f32 biases, double-buffered
    # x / out tiles, f32 per-chunk intermediate + f32 output accumulator.
    vmem_need = (
        2 * Hp * Ip * w_bytes + (Ip + Hp) * 4
        + 2 * tm * Hp * x_bytes            # double-buffered input tiles
        + 2 * tm * Hp * x_bytes            # double-buffered output tiles
        + tm * chunk * 4 + tm * Hp * 4     # f32 fc1/GELU chunk + f32 accumulator
    )
    vmem_limit = int(min(0.85 * vmem_cap, max(32 * 1024 * 1024, 1.25 * vmem_need)))

    cost = pl.CostEstimate(
        flops=4 * M * Hp * Ip,
        transcendentals=M * Ip,
        bytes_accessed=2 * M * Hp * x_bytes + 2 * Hp * Ip * w_bytes + (Hp + Ip) * 4,
    )

    kernel = functools.partial(siglip_mlp_kernel, block_i=chunk)
    resident = dict(pipeline_mode=pl.Buffered(1))  # single-buffer grid-invariant operands

    out2d = pl.pallas_call(
        kernel,
        out_shape=jax.ShapeDtypeStruct((M, Hp), hidden_states.dtype),
        grid=(num_tiles,),
        in_specs=[
            pl.BlockSpec((tm, Hp), lambda i: (i, 0)),              # x tile (pipelined)
            pl.BlockSpec((Hp, Ip), lambda i: (0, 0), **resident),  # W1 (resident)
            pl.BlockSpec((1, Ip), lambda i: (0, 0), **resident),   # b1 (resident)
            pl.BlockSpec((Ip, Hp), lambda i: (0, 0), **resident),  # W2 (resident)
            pl.BlockSpec((1, Hp), lambda i: (0, 0), **resident),   # b2 (resident)
        ],
        out_specs=pl.BlockSpec((tm, Hp), lambda i: (i, 0)),
        compiler_params=pltpu.CompilerParams(
            # TODO(synk): on v7x use pltpu.CORE_PARALLEL (or an explicit core_map)
            # so the M tiles actually shard across its 2 TensorCores.
            dimension_semantics=("parallel",),
            vmem_limit_bytes=vmem_limit,
        ),
        cost_estimate=cost,
    )(x2d, w1p, b1p, w2p, b2p)

    # TODO(synk): for weights too large to stay fully VMEM-resident (f32 so400m on
    # v7x), add a grid axis over I with an f32 (tm, Hp) accumulator scratch and
    # pl.when init/finalize instead of the in-kernel chunk loop.
    if Hp != H:
        out2d = out2d[:, :H]
    return out2d.reshape(B, S, H)


def reference_mlp(hidden_states, w1, b1, w2, b2):
    x = hidden_states.astype(jnp.float32)
    h = x @ w1.astype(jnp.float32) + b1.astype(jnp.float32)
    c = 0.7978845608028654
    g = 0.5 * h * (1.0 + jnp.tanh(c * (h + 0.044715 * h ** 3)))
    return (g @ w2.astype(jnp.float32) + b2.astype(jnp.float32)).astype(hidden_states.dtype)


if __name__ == "__main__":
    # Small synthetic config consistent with SiglipVisionConfig semantics.
    batch, seq = 2, 8
    hidden_size, intermediate_size = 32, 128

    key = jax.random.PRNGKey(0)
    k_x, k_w1, k_b1, k_w2, k_b2 = jax.random.split(key, 5)

    x = jax.random.normal(k_x, (batch, seq, hidden_size), dtype=jnp.float32)
    # nn.Linear weight is (out, in); we store it transposed as (in, out).
    w1 = jax.random.normal(k_w1, (hidden_size, intermediate_size), jnp.float32) * 0.02
    b1 = jax.random.normal(k_b1, (intermediate_size,), jnp.float32) * 0.02
    w2 = jax.random.normal(k_w2, (intermediate_size, hidden_size), jnp.float32) * 0.02
    b2 = jax.random.normal(k_b2, (hidden_size,), jnp.float32) * 0.02

    # Pad + cast the params ONCE (outside the per-call forward).
    w1p, b1p, w2p, b2p = prepare_siglip_mlp_params(w1, b1, w2, b2,
                                                   param_dtype=jnp.bfloat16)

    out = siglip_mlp(x, w1p, b1p, w2p, b2p)
    jax.block_until_ready(out)
    assert out.shape == (batch, seq, hidden_size)

    # Mixed-precision reference: f32 math on the bf16-rounded weights.
    w1r = w1.astype(jnp.bfloat16).astype(jnp.float32)
    w2r = w2.astype(jnp.bfloat16).astype(jnp.float32)
    ref = reference_mlp(x, w1r, b1, w2r, b2)
    assert jnp.allclose(out, ref, atol=1e-2, rtol=1e-2), (
        f"mismatch vs reference: max abs err {jnp.max(jnp.abs(out - ref))}")

    # Second call with M not a multiple of the row tile (exercises the
    # partial-edge-tile path); reuses the already-prepared params.
    x2 = jax.random.normal(k_x, (1, 13, hidden_size), dtype=jnp.float32)
    out2 = siglip_mlp(x2, w1p, b1p, w2p, b2p)
    jax.block_until_ready(out2)
    ref2 = reference_mlp(x2, w1r, b1, w2r, b2)
    assert out2.shape == (1, 13, hidden_size)
    assert jnp.allclose(out2, ref2, atol=1e-2, rtol=1e-2), "mismatch vs reference (ragged M)"

    print("KERNEL_OK")
</pallas_src>

<mosaic_0001>
module attributes {stable_mosaic.version = 11 : i64} {
  func.func @siglip_mlp_kernel(%arg0: i32, %arg1: memref<16x128xf32, #tpu.memory_space<vmem>>, %arg2: memref<128x128xbf16, #tpu.memory_space<vmem>>, %arg3: memref<1x128xf32, #tpu.memory_space<vmem>>, %arg4: memref<128x128xbf16, #tpu.memory_space<vmem>>, %arg5: memref<1x128xf32, #tpu.memory_space<vmem>>, %arg6: memref<16x128xf32, #tpu.memory_space<vmem>>) attributes {dimension_semantics = [#tpu.dimension_semantics<parallel>], iteration_bounds = array<i64: 1>, scalar_prefetch = 0 : i64, scratch_operands = 0 : i64, tpu.core_type = #tpu.core_type<tc>, window_params = [{transform_indices = @transform_0, window_bounds = array<i64: 16, 128>}, {pipeline_mode = #tpu.pipeline_mode<synchronous>, transform_indices = @transform_1, window_bounds = array<i64: 128, 128>}, {pipeline_mode = #tpu.pipeline_mode<synchronous>, transform_indices = @transform_2, window_bounds = array<i64: 1, 128>}, {pipeline_mode = #tpu.pipeline_mode<synchronous>, transform_indices = @transform_3, window_bounds = array<i64: 128, 128>}, {pipeline_mode = #tpu.pipeline_mode<synchronous>, transform_indices = @transform_4, window_bounds = array<i64: 1, 128>}, {transform_indices = @transform_5, window_bounds = array<i64: 16, 128>}]} {
    %c0 = arith.constant 0 : index
    %c0_0 = arith.constant 0 : index
    %0 = vector.load %arg1[%c0, %c0_0] : memref<16x128xf32, #tpu.memory_space<vmem>>, vector<16x128xf32>
    %1 = arith.truncf %0 : vector<16x128xf32> to vector<16x128xbf16>
    %cst = arith.constant 0.000000e+00 : f32
    %2 = vector.broadcast %cst : f32 to vector<16x128xf32>
    %cst_1 = arith.constant 0.797884583 : f32
    %c0_i32 = arith.constant 0 : i32
    %c128_i32 = arith.constant 128 : i32
    %3 = arith.muli %c0_i32, %c128_i32 : i32
    %4 = tpu.assume_multiple %3, 128 : i32
    %c0_2 = arith.constant 0 : index
    %5 = arith.index_cast %4 : i32 to index
    %6 = vector.load %arg2[%c0_2, %5] : memref<128x128xbf16, #tpu.memory_space<vmem>>, vector<128x128xbf16>
    %cst_3 = arith.constant dense<0.000000e+00> : vector<16x128xf32>
    %7 = tpu.matmul %1, %6, %cst_3 {dimension_numbers = #tpu.dot_dimension_numbers<[1], [0], [0], [1], [0, 0, 1, 1], [], []>} : vector<16x128xbf16>, vector<128x128xbf16>, vector<16x128xf32> -> vector<16x128xf32>
    %c0_4 = arith.constant 0 : index
    %8 = arith.index_cast %4 : i32 to index
    %9 = vector.load %arg3[%c0_4, %8] : memref<1x128xf32, #tpu.memory_space<vmem>>, vector<1x128xf32>
    %10 = vector.broadcast %9 : vector<1x128xf32> to vector<16x128xf32>
    %11 = arith.addf %7, %10 : vector<16x128xf32>
    %cst_5 = arith.constant 5.000000e-01 : f32
    %12 = vector.broadcast %cst_5 : f32 to vector<16x128xf32>
    %13 = arith.mulf %12, %11 : vector<16x128xf32>
    %cst_6 = arith.constant 4.471500e-02 : f32
    %14 = vector.broadcast %cst_6 : f32 to vector<16x128xf32>
    %15 = arith.mulf %14, %11 : vector<16x128xf32>
    %16 = arith.mulf %15, %11 : vector<16x128xf32>
    %17 = arith.mulf %16, %11 : vector<16x128xf32>
    %18 = arith.addf %11, %17 : vector<16x128xf32>
    %19 = vector.broadcast %cst_1 : f32 to vector<16x128xf32>
    %20 = arith.mulf %19, %18 : vector<16x128xf32>
    %21 = math.tanh %20 : vector<16x128xf32>
    %cst_7 = arith.constant 1.000000e+00 : f32
    %22 = vector.broadcast %cst_7 : f32 to vector<16x128xf32>
    %23 = arith.addf %22, %21 : vector<16x128xf32>
    %24 = arith.mulf %13, %23 : vector<16x128xf32>
    %25 = arith.truncf %24 : vector<16x128xf32> to vector<16x128xbf16>
    %26 = arith.index_cast %4 : i32 to index
    %c0_8 = arith.constant 0 : index
    %27 = vector.load %arg4[%26, %c0_8] : memref<128x128xbf16, #tpu.memory_space<vmem>>, vector<128x128xbf16>
    %cst_9 = arith.constant dense<0.000000e+00> : vector<16x128xf32>
    %28 = tpu.matmul %25, %27, %cst_9 {dimension_numbers = #tpu.dot_dimension_numbers<[1], [0], [0], [1], [0, 0, 1, 1], [], []>} : vector<16x128xbf16>, vector<128x128xbf16>, vector<16x128xf32> -> vector<16x128xf32>
    %29 = arith.addf %2, %28 : vector<16x128xf32>
    %c1_i32 = arith.constant 1 : i32
    %c0_10 = arith.constant 0 : index
    %c0_11 = arith.constant 0 : index
    %30 = vector.load %arg5[%c0_10, %c0_11] : memref<1x128xf32, #tpu.memory_space<vmem>>, vector<1x128xf32>
    %31 = vector.broadcast %30 : vector<1x128xf32> to vector<16x128xf32>
    %32 = arith.addf %29, %31 : vector<16x128xf32>
    %c0_12 = arith.constant 0 : index
    %c0_13 = arith.constant 0 : index
    %33 = vector.load %arg6[%c0_12, %c0_13] : memref<16x128xf32, #tpu.memory_space<vmem>>, vector<16x128xf32>
    tpu.vector_store %arg6[%c0_12, %c0_13], %32 {strides = array<i32>} : memref<16x128xf32, #tpu.memory_space<vmem>>, vector<16x128xf32>,
    return
  }
  func.func @transform_0(%arg0: i32) -> (i32, i32) {
    %c0_i32 = arith.constant 0 : i32
    %c0_i32_0 = arith.constant 0 : i32
    return %arg0, %c0_i32 : i32, i32
  }
  func.func @transform_1(%arg0: i32) -> (i32, i32) {
    %c0_i32 = arith.constant 0 : i32
    %c0_i32_0 = arith.constant 0 : i32
    %c0_i32_1 = arith.constant 0 : i32
    return %c0_i32, %c0_i32_0 : i32, i32
  }
  func.func @transform_2(%arg0: i32) -> (i32, i32) {
    %c0_i32 = arith.constant 0 : i32
    %c0_i32_0 = arith.constant 0 : i32
    %c0_i32_1 = arith.constant 0 : i32
    return %c0_i32, %c0_i32_0 : i32, i32
  }
  func.func @transform_3(%arg0: i32) -> (i32, i32) {
    %c0_i32 = arith.constant 0 : i32
    %c0_i32_0 = arith.constant 0 : i32
    %c0_i32_1 = arith.constant 0 : i32
    return %c0_i32, %c0_i32_0 : i32, i32
  }
  func.func @transform_4(%arg0: i32) -> (i32, i32) {
    %c0_i32 = arith.constant 0 : i32
    %c0_i32_0 = arith.constant 0 : i32
    %c0_i32_1 = arith.constant 0 : i32
    return %c0_i32, %c0_i32_0 : i32, i32
  }
  func.func @transform_5(%arg0: i32) -> (i32, i32) {
    %c0_i32 = arith.constant 0 : i32
    %c0_i32_0 = arith.constant 0 : i32
    return %arg0, %c0_i32 : i32, i32
  }
}

</mosaic_0001>

<llo_original>
// kernel: siglip_mlp.1
$region0: #{siglip_mlp.1}
  #allocation0 [shape = 'u32[]', space=smem, size = 0x4, offset = 0x4, fixed_abs, tag = 'smem constant byte address 0x4 - core index']
  #allocation1 [shape = 'u32[144,128]{1,0:T(1,128)}', space=vmem, size = 0x12000, scoped, tag = 'internal scratch']
  %s0 = inlined_call_operand.vmem [shape: f32[16,128], index: 0, kind: input, shape index: {}]
  %s1 = inlined_call_operand.hbm [shape: bf16[128,128], index: 1, kind: input, shape index: {}]
  %s2 = inlined_call_operand.vmem [shape: f32[1,128], index: 2, kind: input, shape index: {}]
  %s3 = inlined_call_operand.hbm [shape: bf16[128,128], index: 3, kind: input, shape index: {}]
  %s4 = inlined_call_operand.vmem [shape: f32[1,128], index: 4, kind: input, shape index: {}]
  %s5 = inlined_call_operand.vmem [shape: f32[16,128], index: 5, kind: output, shape index: {}]
  %s6 = sld [smem:[#allocation0]]
  $region38: #{siglip_mlp.1} parent=0
    _
  %s8 = ssub.s32 1, %s6
  %s9 = scalar_select 0, %s8, %s6
  $region1: #{siglip_mlp.1} parent=0
    #allocation2 [shape = 'u8[32768]{0}', space=vmem, size = 0x8000, scoped, tag = 'input window, operand 1, single buffered']
    #allocation3 [shape = 's32[1]{0}', space=sflag, size = 0x4, scoped, tag = 'scoped memory for siglip_mlp.1']
    #allocation4 [shape = 'u8[32768]{0}', space=vmem, size = 0x8000, scoped, tag = 'input window, operand 3, single buffered']
    #allocation5 [shape = 's32[1]{0}', space=sflag, size = 0x4, scoped, tag = 'scoped memory for siglip_mlp.1']
    %10 = vsyncpa [#allocation3], 0
    %11 = vsyncpa [#allocation5], 0
    // Predicated region
    $region2: #{siglip_mlp.1} parent=1 // pred_check
      _
    $region3: #{siglip_mlp.1} parent=1 // pred_check_branch
      %13 = sbr.rel (0) target = $region5
    $region4: #{siglip_mlp.1} parent=1 // pred_region
      _
    $region5: #{siglip_mlp.1} parent=1 // pred_fallthru
      _
    // Predicated region
    $region6: #{siglip_mlp.1} parent=1 // pred_check
      _
    $region7: #{siglip_mlp.1} parent=1 // pred_check_branch
      %15 = sbr.rel (0) target = $region9
    $region8: #{siglip_mlp.1} parent=1 // pred_region
      %s17 = ssub.s32 1024, 1024
      %18 = vsyncadd [#allocation3], %s17
      %s19 = sshll.u32 [#allocation2], 4
      %s20 = int_to_ptr.vmem [resolvable:$true] %s19
      %25 = dma.hbm_to_vmem [thread:$0]  %s1, 1024, %s20, [#allocation3], 64, 64, 4
    $region9: #{siglip_mlp.1} parent=1 // pred_fallthru
      _
    // Predicated region
    $region10: #{siglip_mlp.1} parent=1 // pred_check
      _
    $region11: #{siglip_mlp.1} parent=1 // pred_check_branch
      %27 = sbr.rel (0) target = $region13
    $region12: #{siglip_mlp.1} parent=1 // pred_region
      _
    $region13: #{siglip_mlp.1} parent=1 // pred_fallthru
      _
    // Predicated region
    $region14: #{siglip_mlp.1} parent=1 // pred_check
      _
    $region15: #{siglip_mlp.1} parent=1 // pred_check_branch
      %29 = sbr.rel (0) target = $region17
    $region16: #{siglip_mlp.1} parent=1 // pred_region
      %s31 = ssub.s32 1024, 1024
      %32 = vsyncadd [#allocation5], %s31
      %s33 = sshll.u32 [#allocation4], 4
      %s34 = int_to_ptr.vmem [resolvable:$true] %s33
      %39 = dma.hbm_to_vmem [thread:$0]  %s3, 1024, %s34, [#allocation5], 64, 64, 4
    $region17: #{siglip_mlp.1} parent=1 // pred_fallthru
      _
    // Predicated region
    $region18: #{siglip_mlp.1} parent=1 // pred_check
      _
    $region19: #{siglip_mlp.1} parent=1 // pred_check_branch
      %41 = sbr.rel (0) target = $region21
    $region20: #{siglip_mlp.1} parent=1 // pred_region
      _
    $region21: #{siglip_mlp.1} parent=1 // pred_fallthru
      _
    // Predicated region
    $region22: #{siglip_mlp.1} parent=1 // pred_check
      _
    $region23: #{siglip_mlp.1} parent=1 // pred_check_branch
      %43 = sbr.rel (0) target = $region25
    $region24: #{siglip_mlp.1} parent=1 // pred_region
      %44 = dma.done [#allocation3], 1024
    $region25: #{siglip_mlp.1} parent=1 // pred_fallthru
      _
    // Predicated region
    $region26: #{siglip_mlp.1} parent=1 // pred_check
      _
    $region27: #{siglip_mlp.1} parent=1 // pred_check_branch
      %46 = sbr.rel (0) target = $region29
    $region28: #{siglip_mlp.1} parent=1 // pred_region
      %47 = dma.done [#allocation5], 1024
    $region29: #{siglip_mlp.1} parent=1 // pred_fallthru
      _
    %v49 = vld [vmem:[%s0] sm:$0xff]
    %v50 = vld [vmem:[%s0 + $0x8] sm:$0xff]
    %v51 = vpack.c.bf16 %v50, %v49
    %v52 = vld [vmem:[#allocation2] sm:$0xf]
    %v53 = vld [vmem:[#allocation2 + $0x4] sm:$0xf]
    %v54 = vld [vmem:[#allocation2 + $0x8] sm:$0xf]
    %v55 = vld [vmem:[#allocation2 + $0xc] sm:$0xf]
    %v56 = vld [vmem:[#allocation2 + $0x10] sm:$0xf]
    %v57 = vld [vmem:[#allocation2 + $0x14] sm:$0xf]
    %v58 = vld [vmem:[#allocation2 + $0x18] sm:$0xf]
    %v59 = vld [vmem:[#allocation2 + $0x1c] sm:$0xf]
    %v60 = vld [vmem:[#allocation2 + $0x20] sm:$0xf]
    %v61 = vld [vmem:[#allocation2 + $0x24] sm:$0xf]
    %v62 = vld [vmem:[#allocation2 + $0x28] sm:$0xf]
    %v63 = vld [vmem:[#allocation2 + $0x2c] sm:$0xf]
    %v64 = vld [vmem:[#allocation2 + $0x30] sm:$0xf]
    %v65 = vld [vmem:[#allocation2 + $0x34] sm:$0xf]
    %v66 = vld [vmem:[#allocation2 + $0x38] sm:$0xf]
    %v67 = vld [vmem:[#allocation2 + $0x3c] sm:$0xf]
    %v68 = vld [vmem:[%s2] sm:$0x1]
    %v70 = vlaneseq
    %v71 = vshrl.u32 %v70, 7
    %v72 = vsub.s32 0, %v71
    %v73 = vrot.slane %v68, %v72
    %v91 = vunpack.c.l.b16 %v52
    %v92 = vunpack.c.l.b16 %v53
    %v93 = vunpack.c.l.b16 %v54
    %v94 = vunpack.c.l.b16 %v55
    %v95 = vunpack.c.l.b16 %v56
    %v96 = vunpack.c.l.b16 %v57
    %v97 = vunpack.c.l.b16 %v58
    %v98 = vunpack.c.l.b16 %v59
    %v99 = vunpack.c.l.b16 %v60
    %v100 = vunpack.c.l.b16 %v61
    %v101 = vunpack.c.l.b16 %v62
    %v102 = vunpack.c.l.b16 %v63
    %v103 = vunpack.c.l.b16 %v64
    %v104 = vunpack.c.l.b16 %v65
    %v105 = vunpack.c.l.b16 %v66
    %v106 = vunpack.c.l.b16 %v67
    %v107 = vpack.c.b16 %v92, %v91
    %v108 = vpack.c.b16 %v94, %v93
    %v109 = vpack.c.b16 %v96, %v95
    %v110 = vpack.c.b16 %v98, %v97
    %v111 = vpack.c.b16 %v100, %v99
    %v112 = vpack.c.b16 %v102, %v101
    %v113 = vpack.c.b16 %v104, %v103
    %v114 = vpack.c.b16 %v106, %v105
    %123 = vmatprep.subr.bf16.mxu0 0
    %124 = vmatpush1.bf16.msra.mxu0 %v107
    %125 = vmatprep.subr.bf16.mxu0 0
    %126 = vmatpush1.bf16.msra.mxu0 %v108
    %127 = vmatprep.subr.bf16.mxu0 0
    %128 = vmatpush1.bf16.msra.mxu0 %v109
    %129 = vmatprep.subr.bf16.mxu0 0
    %130 = vmatpush1.bf16.msra.mxu0 %v110
    %131 = vmatprep.subr.bf16.mxu0 0
    %132 = vmatpush1.bf16.msra.mxu0 %v111
    %133 = vmatprep.subr.bf16.mxu0 0
    %134 = vmatpush1.bf16.msra.mxu0 %v112
    %135 = vmatprep.subr.bf16.mxu0 0
    %136 = vmatpush1.bf16.msra.mxu0 %v113
    %137 = vmatprep.subr.bf16.mxu0 0
    %138 = vmatpush1.bf16.msra.mxu0 %v114
    %139 = vmatprep.subr.bf16.mxu0 0
    %140 = vmatpush1.bf16.msra.mxu0 0
    %141 = vmatprep.subr.bf16.mxu0 0
    %142 = vmatpush1.bf16.msra.mxu0 0
    %143 = vmatprep.subr.bf16.mxu0 0
    %144 = vmatpush1.bf16.msra.mxu0 0
    %145 = vmatprep.subr.bf16.mxu0 0
    %146 = vmatpush1.bf16.msra.mxu0 0
    %147 = vmatprep.subr.bf16.mxu0 0
    %148 = vmatpush1.bf16.msra.mxu0 0
    %149 = vmatprep.subr.bf16.mxu0 0
    %150 = vmatpush1.bf16.msra.mxu0 0
    %151 = vmatprep.subr.bf16.mxu0 0
    %152 = vmatpush1.bf16.msra.mxu0 0
    %153 = vmatprep.subr.bf16.mxu0 0
    %154 = vmatpush1.bf16.msra.mxu0 0
    %155 = vmatprep.mubr.bf16.mxu0 0
    %156 = vmatmul.mubr.bf16.gmra.mrb[0].mxu0 %v51
    %v157 = vpop.f32.mrb[0].mxu0
    %v158 = vadd.f32 %v73, %v157
    %v159 = vpop.f32.mrb[0].mxu0
    %v160 = vpop.f32.mrb[0].mxu0
    %v161 = vadd.f32 %v73, %v160
    %v162 = vpop.f32.mrb[0].mxu0
    %163 = vdwg.mxu0
    %v164 = vmul.f32 %v158, 0.5
    %v165 = vmul.f32 %v161, 0.5
    %v166 = vmul.f32 %v158, 0.044715
    %v167 = vmul.f32 %v161, 0.044715
    %v168 = vmul.f32 %v166, %v158
    %v169 = vmul.f32 %v167, %v161
    %v170 = vmul.f32 %v168, %v158
    %v171 = vmul.f32 %v169, %v161
    %v172 = vadd.f32 %v158, %v170
    %v173 = vadd.f32 %v161, %v171
    %v174 = vmul.f32 %v172, 0.7978846
    %v175 = vmul.f32 %v173, 0.7978846
    %v176 = vtanh.pop %v174
    %v177 = vtanh.pop %v175
    %v178 = vadd.f32 %v176, 1.0
    %v179 = vadd.f32 %v177, 1.0
    %v180 = vmul.f32 %v164, %v178
    %v181 = vmul.f32 %v165, %v179
    %v182 = vpack.c.bf16 %v181, %v180
    %v183 = vld [vmem:[#allocation4] sm:$0xf]
    %v184 = vld [vmem:[#allocation4 + $0x4] sm:$0xf]
    %v185 = vld [vmem:[#allocation4 + $0x8] sm:$0xf]
    %v186 = vld [vmem:[#allocation4 + $0xc] sm:$0xf]
    %v187 = vld [vmem:[#allocation4 + $0x10] sm:$0xf]
    %v188 = vld [vmem:[#allocation4 + $0x14] sm:$0xf]
    %v189 = vld [vmem:[#allocation4 + $0x18] sm:$0xf]
    %v190 = vld [vmem:[#allocation4 + $0x1c] sm:$0xf]
    %v191 = vld [vmem:[#allocation4 + $0x20] sm:$0xf]
    %v192 = vld [vmem:[#allocation4 + $0x24] sm:$0xf]
    %v193 = vld [vmem:[#allocation4 + $0x28] sm:$0xf]
    %v194 = vld [vmem:[#allocation4 + $0x2c] sm:$0xf]
    %v195 = vld [vmem:[#allocation4 + $0x30] sm:$0xf]
    %v196 = vld [vmem:[#allocation4 + $0x34] sm:$0xf]
    %v197 = vld [vmem:[#allocation4 + $0x38] sm:$0xf]
    %v198 = vld [vmem:[#allocation4 + $0x3c] sm:$0xf]
    %v199 = vld [vmem:[%s4] sm:$0x1]
    %v201 = vlaneseq
    %v202 = vshrl.u32 %v201, 7
    %v203 = vsub.s32 0, %v202
    %v204 = vrot.slane %v199, %v203
    %v222 = vunpack.c.l.b16 %v183
    %v223 = vunpack.c.l.b16 %v184
    %v224 = vunpack.c.l.b16 %v185
    %v225 = vunpack.c.l.b16 %v186
    %v226 = vunpack.c.l.b16 %v187
    %v227 = vunpack.c.l.b16 %v188
    %v228 = vunpack.c.l.b16 %v189
    %v229 = vunpack.c.l.b16 %v190
    %v230 = vunpack.c.l.b16 %v191
    %v231 = vunpack.c.l.b16 %v192
    %v232 = vunpack.c.l.b16 %v193
    %v233 = vunpack.c.l.b16 %v194
    %v234 = vunpack.c.l.b16 %v195
    %v235 = vunpack.c.l.b16 %v196
    %v236 = vunpack.c.l.b16 %v197
    %v237 = vunpack.c.l.b16 %v198
    %v238 = vpack.c.b16 %v223, %v222
    %v239 = vpack.c.b16 %v225, %v224
    %v240 = vpack.c.b16 %v227, %v226
    %v241 = vpack.c.b16 %v229, %v228
    %v242 = vpack.c.b16 %v231, %v230
    %v243 = vpack.c.b16 %v233, %v232
    %v244 = vpack.c.b16 %v235, %v234
    %v245 = vpack.c.b16 %v237, %v236
    %254 = vmatprep.subr.bf16.mxu0 0
    %255 = vmatpush1.bf16.msra.mxu0 %v238
    %256 = vmatprep.subr.bf16.mxu0 0
    %257 = vmatpush1.bf16.msra.mxu0 %v239
    %258 = vmatprep.subr.bf16.mxu0 0
    %259 = vmatpush1.bf16.msra.mxu0 %v240
    %260 = vmatprep.subr.bf16.mxu0 0
    %261 = vmatpush1.bf16.msra.mxu0 %v241
    %262 = vmatprep.subr.bf16.mxu0 0
    %263 = vmatpush1.bf16.msra.mxu0 %v242
    %264 = vmatprep.subr.bf16.mxu0 0
    %265 = vmatpush1.bf16.msra.mxu0 %v243
    %266 = vmatprep.subr.bf16.mxu0 0
    %267 = vmatpush1.bf16.msra.mxu0 %v244
    %268 = vmatprep.subr.bf16.mxu0 0
    %269 = vmatpush1.bf16.msra.mxu0 %v245
    %270 = vmatprep.subr.bf16.mxu0 0
    %271 = vmatpush1.bf16.msra.mxu0 0
    %272 = vmatprep.subr.bf16.mxu0 0
    %273 = vmatpush1.bf16.msra.mxu0 0
    %274 = vmatprep.subr.bf16.mxu0 0
    %275 = vmatpush1.bf16.msra.mxu0 0
    %276 = vmatprep.subr.bf16.mxu0 0
    %277 = vmatpush1.bf16.msra.mxu0 0
    %278 = vmatprep.subr.bf16.mxu0 0
    %279 = vmatpush1.bf16.msra.mxu0 0
    %280 = vmatprep.subr.bf16.mxu0 0
    %281 = vmatpush1.bf16.msra.mxu0 0
    %282 = vmatprep.subr.bf16.mxu0 0
    %283 = vmatpush1.bf16.msra.mxu0 0
    %284 = vmatprep.subr.bf16.mxu0 0
    %285 = vmatpush1.bf16.msra.mxu0 0
    %286 = vmatprep.mubr.bf16.mxu0 0
    %287 = vmatmul.mubr.bf16.gmra.mrb[0].mxu0 %v182
    %v288 = vpop.f32.mrb[0].mxu0
    %v289 = vadd.f32 %v204, %v288
    %v290 = vpop.f32.mrb[0].mxu0
    %v291 = vpop.f32.mrb[0].mxu0
    %v292 = vadd.f32 %v204, %v291
    %v293 = vpop.f32.mrb[0].mxu0
    %294 = vdwg.mxu0
    %295 = vst [vmem:[%s5] sm:$0xff] %v289
    %296 = vst [vmem:[%s5 + $0x8] sm:$0xff] %v292
    // Predicated region
    $region30: #{siglip_mlp.1} parent=1 // pred_check
      _
    $region31: #{siglip_mlp.1} parent=1 // pred_check_branch
      %298 = sbr.rel (0) target = $region33
    $region32: #{siglip_mlp.1} parent=1 // pred_region
      _
    $region33: #{siglip_mlp.1} parent=1 // pred_fallthru
      _
    // Predicated region
    $region34: #{siglip_mlp.1} parent=1 // pred_check
      _
    $region35: #{siglip_mlp.1} parent=1 // pred_check_branch
      %300 = sbr.rel (0) target = $region37
    $region36: #{siglip_mlp.1} parent=1 // pred_region
      _
    $region37: #{siglip_mlp.1} parent=1 // pred_fallthru
      _
    %301 = vsyncpa [#allocation3], 1
    %302 = vsyncpa [#allocation5], 1

</llo_original>
